<compile_context>
chip_gen: v5e
topology: v5e:2x2
jax: 0.10.0
libtpu: 0.0.40
codegen_flags: <defaults>
</compile_context>

<pallas_src>
import functools

import jax
import jax.numpy as jnp
from jax.experimental import pallas as pl
from jax.experimental.pallas import tpu as pltpu


def _round_up(x: int, m: int) -> int:
    return (x + m - 1) // m * m


def _pick_tile(padded: int, max_tile: int) -> int:
    """Largest 128-multiple <= max_tile that divides `padded` (padded % 128 == 0)."""
    t = max(128, (min(max_tile, padded) // 128) * 128)
    while padded % t != 0:
        t -= 128
    return t


def _transpose_bias_kernel(w_ref, b_ref, o_ref):
    # w_ref: (tile_e, tile_v)  block (j, i) of the (Ep, Vp) weight
    # b_ref: (1, tile_e)       block j of the (1, Ep) bias
    # o_ref: (tile_v, tile_e)  block (i, j) of the (Vp, Ep) output
    # Per-tile XLU transpose + VPU bias add; no identity matrix, no MXU.
    o_ref[...] = jnp.transpose(w_ref[...]) + b_ref[...]


def _sgc_forward_pallas(weight, bias, max_tile_v, max_tile_e):
    E, V = weight.shape

    # Per-dim tiling: full-extent block when the dim fits in one tile (no pad,
    # masked stores are cheaper than extra pad copies at that size); otherwise
    # pad only to a 128-multiple and pick a 128-multiple tile dividing it.
    if V <= max_tile_v:
        Vp, tile_v = V, V
    else:
        Vp = _round_up(V, 128)
        tile_v = _pick_tile(Vp, max_tile_v)
    if E <= max_tile_e:
        Ep, tile_e = E, E
    else:
        Ep = _round_up(E, 128)
        tile_e = _pick_tile(Ep, max_tile_e)

    n_v = Vp // tile_v
    n_e = Ep // tile_e

    # Megacore (v7x: 2 TCs/chip): ensure >= 2 blocks on a "parallel" axis when
    # alignment allows so both cores get work.
    if n_v * n_e == 1 and Vp % 256 == 0:
        tile_v = Vp // 2
        n_v = 2

    w = weight.astype(jnp.float32)
    b = bias.astype(jnp.float32).reshape(1, E)
    needs_pad = (Vp != V) or (Ep != E)
    if needs_pad:
        w = jnp.zeros((Ep, Vp), jnp.float32).at[:E, :V].set(w)
        b = jnp.zeros((1, Ep), jnp.float32).at[:, :E].set(b)

    # Grid: E blocks outer, V blocks inner -> bias block index is unchanged
    # across inner steps, so its DMA is not re-issued.
    grid = (n_e, n_v)

    out_p = pl.pallas_call(
        _transpose_bias_kernel,
        out_shape=jax.ShapeDtypeStruct((Vp, Ep), jnp.float32),
        grid_spec=pltpu.PrefetchScalarGridSpec(
            num_scalar_prefetch=0,
            grid=grid,
            in_specs=[
                # Weight block (j, i) of (Ep, Vp) becomes output block (i, j)
                # of (Vp, Ep) after the in-kernel transpose.
                pl.BlockSpec((tile_e, tile_v), lambda j, i: (j, i)),
                pl.BlockSpec((1, tile_e), lambda j, i: (0, j)),
            ],
            out_specs=pl.BlockSpec((tile_v, tile_e), lambda j, i: (i, j)),
        ),
        compiler_params=pltpu.CompilerParams(
            dimension_semantics=("parallel", "parallel"),
            vmem_limit_bytes=32 * 1024 * 1024,
        ),
        cost_estimate=pl.CostEstimate(
            flops=0,
            transcendentals=0,
            bytes_accessed=(2 * Vp * Ep + Ep) * 4,
        ),
    )(w, b)

    if needs_pad:
        out_p = out_p[:V, :E]
    return out_p


@functools.partial(
    jax.jit,
    static_argnames=("max_tile_v", "max_tile_e", "force_pallas",
                     "small_bytes_threshold"))
def sgc_forward(weight, bias, *, max_tile_v=1024, max_tile_e=256,
                force_pallas=False, small_bytes_threshold=2 * 1024 * 1024):
    """SGC embedding forward: eye(V) @ W.T + b  ==  W.T + b.

    weight: (E, V)  (nn.Linear(V, E).weight layout)
    bias:   (E,)
    returns (V, E) f32
    """
    E, V = weight.shape
    if not force_pallas and V * E * 4 <= small_bytes_threshold:
        # Tiny op (MKGNN defaults: 256x64 = 64 KiB): pallas_call dispatch would
        # dominate; emit plain transpose+bias so XLA fuses it into the consumer.
        return weight.astype(jnp.float32).T + bias.astype(jnp.float32)
    return _sgc_forward_pallas(weight, bias, max_tile_v, max_tile_e)


if __name__ == "__main__":
    key = jax.random.PRNGKey(0)

    # --- MKGNN defaults: voc_size = vocab_size[2] = 256, emb_dim = 64 ---
    voc_size, emb_dim = 256, 64
    kw, kb, kw2, kb2 = jax.random.split(key, 4)
    bound = 1.0 / (voc_size ** 0.5)
    weight = jax.random.uniform(kw, (emb_dim, voc_size), dtype=jnp.float32,
                                minval=-bound, maxval=bound)
    bias = jax.random.uniform(kb, (emb_dim,), dtype=jnp.float32,
                              minval=-bound, maxval=bound)

    # 1) Pallas path forced (grid (1, 2): V split so both v7x cores get a block).
    out_pallas = jax.block_until_ready(
        sgc_forward(weight, bias, force_pallas=True))
    # 2) Default dispatch at this size: small -> plain-JAX fusable path.
    out_fused = jax.block_until_ready(sgc_forward(weight, bias))

    x = jnp.eye(voc_size, dtype=jnp.float32)
    ref = jnp.dot(x, weight.T, precision=jax.lax.Precision.HIGHEST) + bias
    assert out_pallas.shape == (voc_size, emb_dim)
    assert out_fused.shape == (voc_size, emb_dim)
    assert jnp.allclose(out_pallas, ref, atol=1e-6, rtol=1e-6)
    assert jnp.allclose(out_fused, ref, atol=1e-6, rtol=1e-6)

    # --- Awkward shape exercising the pad + multi-block tiled Pallas path ---
    V2, E2 = 300, 200
    bound2 = 1.0 / (V2 ** 0.5)
    weight2 = jax.random.uniform(kw2, (E2, V2), dtype=jnp.float32,
                                 minval=-bound2, maxval=bound2)
    bias2 = jax.random.uniform(kb2, (E2,), dtype=jnp.float32,
                               minval=-bound2, maxval=bound2)
    out2 = jax.block_until_ready(
        sgc_forward(weight2, bias2, force_pallas=True,
                    max_tile_v=128, max_tile_e=128))
    ref2 = weight2.T + bias2
    assert out2.shape == (V2, E2)
    assert jnp.allclose(out2, ref2, atol=1e-6, rtol=1e-6)

    print("KERNEL_OK")
</pallas_src>

<mosaic_0001>
module attributes {stable_mosaic.version = 11 : i64} {
  func.func @_transpose_bias_kernel(%arg0: i32, %arg1: i32, %arg2: memref<64x128xf32, #tpu.memory_space<vmem>>, %arg3: memref<1x64xf32, #tpu.memory_space<vmem>>, %arg4: memref<128x64xf32, #tpu.memory_space<vmem>>) attributes {dimension_semantics = [#tpu.dimension_semantics<parallel>, #tpu.dimension_semantics<parallel>], iteration_bounds = array<i64: 1, 2>, scalar_prefetch = 0 : i64, scratch_operands = 0 : i64, tpu.core_type = #tpu.core_type<tc>, window_params = [{transform_indices = @transform_0, window_bounds = array<i64: 64, 128>}, {transform_indices = @transform_1, window_bounds = array<i64: 1, 64>}, {transform_indices = @transform_2, window_bounds = array<i64: 128, 64>}]} {
    %c0 = arith.constant 0 : index
    %c0_0 = arith.constant 0 : index
    %0 = vector.load %arg2[%c0, %c0_0] : memref<64x128xf32, #tpu.memory_space<vmem>>, vector<64x128xf32>
    %1 = tpu.transpose %0, [1, 0] : vector<64x128xf32> -> vector<128x64xf32>
    %c0_1 = arith.constant 0 : index
    %c0_2 = arith.constant 0 : index
    %2 = vector.load %arg3[%c0_1, %c0_2] : memref<1x64xf32, #tpu.memory_space<vmem>>, vector<1x64xf32>
    %3 = vector.broadcast %2 : vector<1x64xf32> to vector<128x64xf32>
    %4 = arith.addf %1, %3 : vector<128x64xf32>
    %c0_3 = arith.constant 0 : index
    %c0_4 = arith.constant 0 : index
    %5 = vector.load %arg4[%c0_3, %c0_4] : memref<128x64xf32, #tpu.memory_space<vmem>>, vector<128x64xf32>
    tpu.vector_store %arg4[%c0_3, %c0_4], %4 {strides = array<i32>} : memref<128x64xf32, #tpu.memory_space<vmem>>, vector<128x64xf32>,
    return
  }
  func.func @transform_0(%arg0: i32, %arg1: i32) -> (i32, i32) {
    %c0_i32 = arith.constant 0 : i32
    return %arg0, %arg1 : i32, i32
  }
  func.func @transform_1(%arg0: i32, %arg1: i32) -> (i32, i32) {
    %c0_i32 = arith.constant 0 : i32
    %c0_i32_0 = arith.constant 0 : i32
    return %c0_i32, %arg0 : i32, i32
  }
  func.func @transform_2(%arg0: i32, %arg1: i32) -> (i32, i32) {
    %c0_i32 = arith.constant 0 : i32
    return %arg1, %arg0 : i32, i32
  }
}

</mosaic_0001>

<llo_original>
// kernel: sgc_forward.1
$region0: #{sgc_forward.1}
  #allocation0 [shape = 'u32[]', space=smem, size = 0x4, offset = 0x4, fixed_abs, tag = 'smem constant byte address 0x4 - core index']
  #allocation1 [shape = 'u32[72,128]{1,0:T(1,128)}', space=vmem, size = 0x9000, scoped, tag = 'internal scratch']
  %s0 = inlined_call_operand.hbm [shape: f32[64,256], index: 0, kind: input, shape index: {}]
  %s1 = inlined_call_operand.vmem [shape: f32[1,64], index: 1, kind: input, shape index: {}]
  %s2 = inlined_call_operand.vmem [shape: f32[256,64], index: 2, kind: output, shape index: {}]
  %s3 = sld [smem:[#allocation0]]
  $region45: #{sgc_forward.1} parent=0
    _
  %s5 = ssub.s32 1, %s3
  %s6 = scalar_select 0, %s5, %s3
  $region1: #{sgc_forward.1} parent=0
    #allocation2 [shape = 'u8[65536]{0}', space=vmem, size = 0x10000, scoped, tag = 'input window, operand 0']
    #allocation3 [shape = 's32[2]{0}', space=sflag, size = 0x8, scoped, tag = 'scoped memory for sgc_forward.1']
    %7 = vsyncpa [#allocation3], 0
    %s8 = scalar_lea.sflag [#allocation3], 1
    %9 = vsyncpa %s8, 0
    loop: start=0, step=1, limit=4
    $region2: #{sgc_forward.1} parent=1 // loop_pre_header
      _
    $region3: #{sgc_forward.1} parent=1 // loop_header
      %s11 = sphi 0, %s15
      %p12 = scmp.ge.s32.totalorder %s11, 4
      %s18 = sphi 0, %s30
      %s19 = sphi 0, %s26
      %s20 = sphi 0, %s18
      %s21 = sphi 0, %s19
      %s22 = sphi 0, %s20
      %s23 = sphi 0, %s21
      %s35 = sphi 0, %s37
      %s38 = sphi 0, %s35
      %s39 = sphi 0, %s38
      %s55 = sphi 0, %s39
      %s61 = sphi 0, %s63
      %s64 = sphi 0, %s61
      %s65 = sphi 0, %s64
      %s81 = sphi 0, %s65
      %s89 = sphi 0, %s91
      %s92 = sphi 0, %s89
      %s93 = sphi 0, %s92
      %s109 = sphi 0, %s93
    $region4: #{sgc_forward.1} parent=1 // loop_header_branch
      %14 = sbr.rel (%p12) target = $region8
    $region5: #{sgc_forward.1} parent=1 // loop_body
      %s16 = ssub.s32 %s11, 1
      %s17 = ssub.s32 %s11, 2
      %s24 = sadd.s32 1, %s19
      %p25 = scmp.ge.s32.totalorder %s24, 2
      %s26 = scalar_select %p25, 0, %s24
      %s27 = sadd.s32 1, %s18
      %s28 = scalar_select %p25, %s27, %s18
      %p29 = scmp.ge.s32.totalorder %s28, 1
      %s30 = scalar_select %p29, 0, %s28
      %s31 = ssub.s32 %s18, %s30
      %s32 = ssub.s32 %s19, %s26
      %s33 = sor.u32 %s31, %s32
      %p34 = scmp.eq.s32.totalorder %s33, 0
      %s36 = sadd.s32 %s35, 1
      %s37 = scalar_select %p34, %s35, %s36
      %p40 = pneg %p34
      %p41 = scmp.eq.s32.totalorder %s11, 1
      %p42 = por %p40, %p41
      %p43 = scmp.ne.s32.totalorder %s35, %s38
      %p44 = scmp.eq.s32.totalorder %s11, 0
      %p45 = por %p43, %p44
      %p46 = scmp.ne.s32.totalorder %s35, %s38
      %p47 = scmp.eq.s32.totalorder %s16, 1
      %p48 = por %p46, %p47
      %p49 = scmp.ne.s32.totalorder %s38, %s39
      %p50 = scmp.eq.s32.totalorder %s16, 0
      %p51 = por %p49, %p50
      %p52 = scmp.ne.s32.totalorder %s38, %s39
      %p53 = scmp.eq.s32.totalorder %s17, 1
      %p54 = por %p52, %p53
      %p56 = scmp.ne.s32.totalorder %s39, %s55
      %p57 = scmp.eq.s32.totalorder %s17, 0
      %p58 = por %p56, %p57
      %s59 = ssub.s32 %s18, %s30
      %p60 = scmp.eq.s32.totalorder %s59, 0
      %s62 = sadd.s32 %s61, 1
      %s63 = scalar_select %p60, %s61, %s62
      %p66 = pneg %p60
      %p67 = scmp.eq.s32.totalorder %s11, 1
      %p68 = por %p66, %p67
      %p69 = scmp.ne.s32.totalorder %s61, %s64
      %p70 = scmp.eq.s32.totalorder %s11, 0
      %p71 = por %p69, %p70
      %p72 = scmp.ne.s32.totalorder %s61, %s64
      %p73 = scmp.eq.s32.totalorder %s16, 1
      %p74 = por %p72, %p73
      %p75 = scmp.ne.s32.totalorder %s64, %s65
      %p76 = scmp.eq.s32.totalorder %s16, 0
      %p77 = por %p75, %p76
      %p78 = scmp.ne.s32.totalorder %s64, %s65
      %p79 = scmp.eq.s32.totalorder %s17, 1
      %p80 = por %p78, %p79
      %p82 = scmp.ne.s32.totalorder %s65, %s81
      %p83 = scmp.eq.s32.totalorder %s17, 0
      %p84 = por %p82, %p83
      %s85 = ssub.s32 %s19, %s26
      %s86 = ssub.s32 %s18, %s30
      %s87 = sor.u32 %s85, %s86
      %p88 = scmp.eq.s32.totalorder %s87, 0
      %s90 = sadd.s32 %s89, 1
      %s91 = scalar_select %p88, %s89, %s90
      %p94 = pneg %p88
      %p95 = scmp.eq.s32.totalorder %s11, 1
      %p96 = por %p94, %p95
      %p97 = scmp.ne.s32.totalorder %s89, %s92
      %p98 = scmp.eq.s32.totalorder %s11, 0
      %p99 = por %p97, %p98
      %p100 = scmp.ne.s32.totalorder %s89, %s92
      %p101 = scmp.eq.s32.totalorder %s16, 1
      %p102 = por %p100, %p101
      %p103 = scmp.ne.s32.totalorder %s92, %s93
      %p104 = scmp.eq.s32.totalorder %s16, 0
      %p105 = por %p103, %p104
      %p106 = scmp.ne.s32.totalorder %s92, %s93
      %p107 = scmp.eq.s32.totalorder %s17, 1
      %p108 = por %p106, %p107
      %p110 = scmp.ne.s32.totalorder %s93, %s109
      %p111 = scmp.eq.s32.totalorder %s17, 0
      %p112 = por %p110, %p111
      %p113 = scmp.le.s32.totalorder 1, %s11
      %p114 = scmp.lt.s32.totalorder %s11, 3
      %p115 = pnand %p113, %p114
      %p116 = pneg %p115
      // Predicated region
      $region9: #{sgc_forward.1} parent=5 // pred_check
        _
      $region10: #{sgc_forward.1} parent=5 // pred_check_branch
        %118 = sbr.rel (%p115) target = $region12
      $region11: #{sgc_forward.1} parent=5 // pred_region
        %s119 = ssub.s32 %s11, 1
        // Predicated region
        $region13: #{sgc_forward.1} parent=11 // pred_check
          %p120 = pneg %p77
        $region14: #{sgc_forward.1} parent=11 // pred_check_branch
          %122 = sbr.rel (%p120) target = $region16
        $region15: #{sgc_forward.1} parent=11 // pred_region
          %p123 = scmp.lt.s32.totalorder %s20, 0
          %s124 = scalar_select %p123, %s20, 0
          %s125 = scalar_lea.vmem %s1, %s124
        $region16: #{sgc_forward.1} parent=11 // pred_fallthru
          _
      $region12: #{sgc_forward.1} parent=5 // pred_fallthru
        _
      %p126 = scmp.lt.s32.totalorder %s11, 2
      // Predicated region
      $region17: #{sgc_forward.1} parent=5 // pred_check
        %p127 = pneg %p126
      $region18: #{sgc_forward.1} parent=5 // pred_check_branch
        %129 = sbr.rel (%p127) target = $region20
      $region19: #{sgc_forward.1} parent=5 // pred_region
        // Predicated region
        $region21: #{sgc_forward.1} parent=19 // pred_check
          %p130 = pneg %p45
        $region22: #{sgc_forward.1} parent=19 // pred_check_branch
          %132 = sbr.rel (%p130) target = $region24
        $region23: #{sgc_forward.1} parent=19 // pred_region
          %s133 = sand.u32 %s35, 1
          %s134 = scalar_lea.sflag [#allocation3], %s133
          %s135 = sand.u32 %s35, 1
          %s136 = smul.addr %s135, 64
          %s137 = scalar_lea.vmem [#allocation2], %s136
          %s138 = smul.u32 8, %s18
          %140 = vsyncadd %s134, 0
          %s141 = smul.addr %s138, 2
          %s142 = sadd.s32 %s19, %s141
          %s143 = smul.addr %s142, 8
          %s144 = scalar_lea.hbm %s0, %s143
          %s145 = sshll.u32 %s144, 4
          %s146 = int_to_ptr.hbm [resolvable:$true] %s145
          %s147 = sshll.u32 %s137, 4
          %s148 = int_to_ptr.vmem [resolvable:$true] %s147
          %153 = dma.hbm_to_vmem [thread:$0]  %s146, 1024, %s148, %s134, 256, 128, 8
        $region24: #{sgc_forward.1} parent=19 // pred_fallthru
          _
      $region20: #{sgc_forward.1} parent=5 // pred_fallthru
        _
      %p154 = scmp.le.s32.totalorder 1, %s11
      %p155 = scmp.lt.s32.totalorder %s11, 3
      %p156 = pnand %p154, %p155
      %p157 = pneg %p156
      // Predicated region
      $region25: #{sgc_forward.1} parent=5 // pred_check
        _
      $region26: #{sgc_forward.1} parent=5 // pred_check_branch
        %159 = sbr.rel (%p156) target = $region28
      $region27: #{sgc_forward.1} parent=5 // pred_region
        %s160 = ssub.s32 %s11, 1
        %s161 = sand.u32 %s38, 1
        %s162 = scalar_lea.sflag [#allocation3], %s161
        %s163 = sand.u32 %s38, 1
        %s164 = smul.addr %s163, 64
        %s165 = scalar_lea.vmem [#allocation2], %s164
        // Predicated region
        $region29: #{sgc_forward.1} parent=27 // pred_check
          %p166 = pneg %p51
        $region30: #{sgc_forward.1} parent=27 // pred_check_branch
          %168 = sbr.rel (%p166) target = $region32
        $region31: #{sgc_forward.1} parent=27 // pred_region
          %170 = dma.done %s162, 1024
        $region32: #{sgc_forward.1} parent=27 // pred_fallthru
          _
        %s171 = sand.u32 %s38, 1
        %s172 = scalar_lea.sflag [#allocation3], %s171
        %s173 = sand.u32 %s38, 1
        %s174 = smul.addr %s173, 64
        %s175 = scalar_lea.vmem [#allocation2], %s174
        %p176 = pneg %p51
        %p177 = pneg %p48
        %p178 = scmp.lt.s32.totalorder %s20, 0
        %s179 = scalar_select %p178, %s20, 0
        %s180 = scalar_lea.vmem %s1, %s179
        %p181 = pneg %p77
        %p182 = pneg %p74
        %p183 = pneg %p105
        %p184 = pneg %p102
        %s185 = smul.u32 16, %s21
        %p186 = scmp.lt.s32.totalorder %s185, 31
        %s187 = scalar_select %p186, %s185, 31
        %p188 = scmp.lt.s32.totalorder %s20, 0
        %s189 = scalar_select %p188, %s20, 0
        %s190 = sadd.s32 %s189, %s187
        %s191 = smul.addr %s190, 8
        %s192 = scalar_lea.vmem %s2, %s191
        %s193 = smul.u32 8, %s20
        %p194 = scmp.lt.s32.totalorder %s20, 0
        %s195 = scalar_select %p194, %s20, 0
        %s196 = scalar_lea.vmem %s1, %s195
        %s197 = smul.u32 16, %s21
        %p198 = scmp.lt.s32.totalorder %s197, 31
        %s199 = scalar_select %p198, %s197, 31
        %p200 = scmp.lt.s32.totalorder %s20, 0
        %s201 = scalar_select %p200, %s20, 0
        %s202 = sadd.s32 %s201, %s199
        %s203 = smul.addr %s202, 8
        %s204 = scalar_lea.vmem %s2, %s203
        %s205 = smul.u32 16, %s21
        %v206 = vld [vmem:[%s165] sm:$0xff]
        %v207 = vld [vmem:[%s165 + $0x8] sm:$0xff]
        %v208 = vld [vmem:[%s165 + $0x10] sm:$0xff]
        %v209 = vld [vmem:[%s165 + $0x18] sm:$0xff]
        %v210 = vld [vmem:[%s165 + $0x20] sm:$0xff]
        %v211 = vld [vmem:[%s165 + $0x28] sm:$0xff]
        %v212 = vld [vmem:[%s165 + $0x30] sm:$0xff]
        %v213 = vld [vmem:[%s165 + $0x38] sm:$0xff]
        %214 = vxpose.xlu0.b32.start [1/16] %v206, 128
        %215 = vxpose.xlu0.b32.cont [2/16] %v207, 128
        %216 = vxpose.xlu0.b32.cont [3/16] %v208, 128
        %217 = vxpose.xlu0.b32.cont [4/16] %v209, 128
        %218 = vxpose.xlu0.b32.cont [5/16] %v210, 128
        %219 = vxpose.xlu0.b32.cont [6/16] %v211, 128
        %220 = vxpose.xlu0.b32.cont [7/16] %v212, 128
        %221 = vxpose.xlu0.b32.cont [8/16] %v213, 128
        %222 = vxpose.xlu0.b32.cont [9/16] 0.0, 128
        %223 = vxpose.xlu0.b32.cont [10/16] 0.0, 128
        %224 = vxpose.xlu0.b32.cont [11/16] 0.0, 128
        %225 = vxpose.xlu0.b32.cont [12/16] 0.0, 128
        %226 = vxpose.xlu0.b32.cont [13/16] 0.0, 128
        %227 = vxpose.xlu0.b32.cont [14/16] 0.0, 128
        %228 = vxpose.xlu0.b32.cont [15/16] 0.0, 128
        %229 = vxpose.xlu0.b32.end [16/16] 0.0, 128
        %v230 = vpop.trf.xlu0
        %v231 = vpop.trf.xlu0
        %v232 = vpop.trf.xlu0
        %v233 = vpop.trf.xlu0
        %v234 = vpop.trf.xlu0
        %v235 = vpop.trf.xlu0
        %v236 = vpop.trf.xlu0
        %v237 = vpop.trf.xlu0
        %v238 = vpop.trf.xlu0
        %v239 = vpop.trf.xlu0
        %v240 = vpop.trf.xlu0
        %v241 = vpop.trf.xlu0
        %v242 = vpop.trf.xlu0
        %v243 = vpop.trf.xlu0
        %v244 = vpop.trf.xlu0
        %v245 = vpop.trf.xlu0
        %v246 = vld [vmem:[%s196] sm:$0x1]
        %v248 = vperm.slane %v246, 0
        %v250 = vadd.f32 %v230, %v248
        %v251 = vadd.f32 %v231, %v248
        %v252 = vadd.f32 %v232, %v248
        %v253 = vadd.f32 %v233, %v248
        %v254 = vadd.f32 %v234, %v248
        %v255 = vadd.f32 %v235, %v248
        %v256 = vadd.f32 %v236, %v248
        %v257 = vadd.f32 %v237, %v248
        %v258 = vadd.f32 %v238, %v248
        %v259 = vadd.f32 %v239, %v248
        %v260 = vadd.f32 %v240, %v248
        %v261 = vadd.f32 %v241, %v248
        %v262 = vadd.f32 %v242, %v248
        %v263 = vadd.f32 %v243, %v248
        %v264 = vadd.f32 %v244, %v248
        %v265 = vadd.f32 %v245, %v248
        %vm266 = vcmask 523264
        %267 = vst.msk [vmem:[%s204] sm:$0xff] %vm266, %v250
        %268 = vst.msk [vmem:[%s204 + $0x8] sm:$0xff] %vm266, %v251
        %269 = vst.msk [vmem:[%s204 + $0x10] sm:$0xff] %vm266, %v252
        %270 = vst.msk [vmem:[%s204 + $0x18] sm:$0xff] %vm266, %v253
        %271 = vst.msk [vmem:[%s204 + $0x20] sm:$0xff] %vm266, %v254
        %272 = vst.msk [vmem:[%s204 + $0x28] sm:$0xff] %vm266, %v255
        %273 = vst.msk [vmem:[%s204 + $0x30] sm:$0xff] %vm266, %v256
        %274 = vst.msk [vmem:[%s204 + $0x38] sm:$0xff] %vm266, %v257
        %275 = vst.msk [vmem:[%s204 + $0x40] sm:$0xff] %vm266, %v258
        %276 = vst.msk [vmem:[%s204 + $0x48] sm:$0xff] %vm266, %v259
        %277 = vst.msk [vmem:[%s204 + $0x50] sm:$0xff] %vm266, %v260
        %278 = vst.msk [vmem:[%s204 + $0x58] sm:$0xff] %vm266, %v261
        %279 = vst.msk [vmem:[%s204 + $0x60] sm:$0xff] %vm266, %v262
        %280 = vst.msk [vmem:[%s204 + $0x68] sm:$0xff] %vm266, %v263
        %281 = vst.msk [vmem:[%s204 + $0x70] sm:$0xff] %vm266, %v264
        %282 = vst.msk [vmem:[%s204 + $0x78] sm:$0xff] %vm266, %v265
        %s283 = smul.u32 16, %s21
        %p284 = scmp.lt.s32.totalorder %s283, 31
        %s285 = scalar_select %p284, %s283, 31
        %p286 = scmp.lt.s32.totalorder %s20, 0
        %s287 = scalar_select %p286, %s20, 0
        %s288 = sadd.s32 %s287, %s285
        %s289 = smul.addr %s288, 8
        %s290 = scalar_lea.vmem %s2, %s289
        // Predicated region
        $region33: #{sgc_forward.1} parent=27 // pred_check
          %p291 = pneg %p102
        $region34: #{sgc_forward.1} parent=27 // pred_check_branch
          %293 = sbr.rel (%p291) target = $region36
        $region35: #{sgc_forward.1} parent=27 // pred_region
          %s294 = smul.u32 16, %s21
        $region36: #{sgc_forward.1} parent=27 // pred_fallthru
          _
      $region28: #{sgc_forward.1} parent=5 // pred_fallthru
        _
      %p295 = scmp.le.s32.totalorder 2, %s11
      // Predicated region
      $region37: #{sgc_forward.1} parent=5 // pred_check
        %p296 = pneg %p295
      $region38: #{sgc_forward.1} parent=5 // pred_check_branch
        %298 = sbr.rel (%p296) target = $region40
      $region39: #{sgc_forward.1} parent=5 // pred_region
        %s299 = ssub.s32 %s11, 2
        // Predicated region
        $region41: #{sgc_forward.1} parent=39 // pred_check
          %p300 = pneg %p108
        $region42: #{sgc_forward.1} parent=39 // pred_check_branch
          %302 = sbr.rel (%p300) target = $region44
        $region43: #{sgc_forward.1} parent=39 // pred_region
          %s303 = smul.u32 16, %s23
          %p304 = scmp.lt.s32.totalorder %s303, 31
          %s305 = scalar_select %p304, %s303, 31
          %p306 = scmp.lt.s32.totalorder %s22, 0
          %s307 = scalar_select %p306, %s22, 0
          %s308 = sadd.s32 %s307, %s305
          %s309 = smul.addr %s308, 8
          %s310 = scalar_lea.vmem %s2, %s309
        $region44: #{sgc_forward.1} parent=39 // pred_fallthru
          _
      $region40: #{sgc_forward.1} parent=5 // pred_fallthru
        _
    $region6: #{sgc_forward.1} parent=1 // loop_footer
      %s15 = sadd.s32 1, %s11
    $region7: #{sgc_forward.1} parent=1 // loop_footer_branch
      %10 = sbr.rel target = $region3
    $region8: #{sgc_forward.1} parent=1 // loop_exit
      _
    %311 = vsyncpa [#allocation3], 1
    %s312 = scalar_lea.sflag [#allocation3], 1
    %313 = vsyncpa %s312, 1

</llo_original>
